<compile_context>
chip_gen: v7x
topology: tpu7x:2x2x1
jax: 0.10.0
libtpu: 0.0.40
codegen_flags: <defaults>
</compile_context>

<pallas_src>
import jax
import jax.numpy as jnp
from jax.experimental import pallas as pl
from jax.experimental.pallas import tpu as pltpu


def _answer_classifier_kernel(x_ref, w_ref, b_ref, o_ref):
    # x: (B, D), w: (D, P) [pre-transposed at init], b: (1, P) -> o: (B, P)
    # One MXU pass with f32 accumulation, then a broadcast VPU bias add.
    acc = jnp.dot(x_ref[...], w_ref[...], preferred_element_type=jnp.float32)
    o_ref[...] = acc + b_ref[...]


class AnswerClassifierPallas:
    """Pallas-backed equivalent of the PyTorch AnswerClassifier module.

    Parameters are prepared once at construction time (transpose + reshape +
    cast), so the per-forward path is a single pallas_call with no extra
    wrapper-side XLA ops.
    """

    def __init__(self, weight, bias):
        # weight: (P, D) in native PyTorch layout; bias: (P,)
        weight = jnp.asarray(weight, jnp.float32)
        bias = jnp.asarray(bias, jnp.float32)
        self.P, self.D = weight.shape
        assert bias.shape == (self.P,)
        # Hoisted, one-time parameter prep (amortized across all forwards).
        self.w_t = jnp.transpose(weight)          # (D, P)
        self.b2 = bias[None, :]                   # (1, P)

    def __call__(self, x):
        """x: (D,) or (B, D) -> logits (P,) or (B, P)."""
        squeeze = (x.ndim == 1)
        x2 = x[None, :] if squeeze else x
        x2 = x2.astype(jnp.float32)
        B, D = x2.shape
        assert D == self.D, (D, self.D)
        P = self.P

        out = pl.pallas_call(
            _answer_classifier_kernel,
            out_shape=jax.ShapeDtypeStruct((B, P), jnp.float32),
            in_specs=[
                pl.BlockSpec(memory_space=pltpu.MemorySpace.VMEM),  # x
                pl.BlockSpec(memory_space=pltpu.MemorySpace.VMEM),  # Wt
                pl.BlockSpec(memory_space=pltpu.MemorySpace.VMEM),  # b
            ],
            out_specs=pl.BlockSpec(memory_space=pltpu.MemorySpace.VMEM),
            cost_estimate=pl.CostEstimate(
                flops=2 * B * D * P,
                transcendentals=0,
                bytes_accessed=4 * (B * D + D * P + P + B * P),
            ),
        )(x2, self.w_t, self.b2)

        return out[0] if squeeze else out


if __name__ == "__main__":
    # Small shapes consistent with the module.
    graph_representation_dim = 32   # D
    num_place_entities = 16         # P
    batch = 2                       # batched path (amortizes one pallas_call)

    key = jax.random.PRNGKey(0)
    k_x, k_xb, k_w, k_b = jax.random.split(key, 4)

    # Deterministic parameter init, mimicking nn.Linear's U(-1/sqrt(D), 1/sqrt(D)).
    bound = 1.0 / jnp.sqrt(jnp.float32(graph_representation_dim))
    weight = jax.random.uniform(
        k_w, (num_place_entities, graph_representation_dim),
        minval=-bound, maxval=bound, dtype=jnp.float32)
    bias = jax.random.uniform(
        k_b, (num_place_entities,), minval=-bound, maxval=bound,
        dtype=jnp.float32)

    clf = AnswerClassifierPallas(weight, bias)

    # 1) Exact PyTorch-module semantics: single (D,) vector -> (P,) logits.
    x_single = jax.random.normal(k_x, (graph_representation_dim,), dtype=jnp.float32)
    logits_single = clf(x_single)
    jax.block_until_ready(logits_single)
    ref_single = x_single @ weight.T + bias
    assert logits_single.shape == (num_place_entities,)
    assert jnp.allclose(logits_single, ref_single, atol=1e-5, rtol=1e-5)

    # 2) Batched path: (B, D) -> (B, P) in a single pallas_call.
    x_batch = jax.random.normal(
        k_xb, (batch, graph_representation_dim), dtype=jnp.float32)
    logits_batch = clf(x_batch)
    jax.block_until_ready(logits_batch)
    ref_batch = x_batch @ weight.T + bias
    assert logits_batch.shape == (batch, num_place_entities)
    assert jnp.allclose(logits_batch, ref_batch, atol=1e-5, rtol=1e-5)

    print("KERNEL_OK")
</pallas_src>

<mosaic_0001>
module attributes {stable_mosaic.version = 11 : i64} {
  func.func @_answer_classifier_kernel(%arg0: memref<1x32xf32, #tpu.memory_space<vmem>>, %arg1: memref<32x16xf32, #tpu.memory_space<vmem>>, %arg2: memref<1x16xf32, #tpu.memory_space<vmem>>, %arg3: memref<1x16xf32, #tpu.memory_space<vmem>>) attributes {dimension_semantics = [], scalar_prefetch = 0 : i64, scratch_operands = 0 : i64, tpu.core_type = #tpu.core_type<tc>} {
    %c0 = arith.constant 0 : index
    %c0_0 = arith.constant 0 : index
    %0 = vector.load %arg0[%c0, %c0_0] : memref<1x32xf32, #tpu.memory_space<vmem>>, vector<1x32xf32>
    %c0_1 = arith.constant 0 : index
    %c0_2 = arith.constant 0 : index
    %1 = vector.load %arg1[%c0_1, %c0_2] : memref<32x16xf32, #tpu.memory_space<vmem>>, vector<32x16xf32>
    %cst = arith.constant dense<0.000000e+00> : vector<1x16xf32>
    %2 = tpu.matmul %0, %1, %cst {dimension_numbers = #tpu.dot_dimension_numbers<[1], [0], [0], [1], [0, 0, 1, 1], [], []>} : vector<1x32xf32>, vector<32x16xf32>, vector<1x16xf32> -> vector<1x16xf32>
    %c0_3 = arith.constant 0 : index
    %c0_4 = arith.constant 0 : index
    %3 = vector.load %arg2[%c0_3, %c0_4] : memref<1x16xf32, #tpu.memory_space<vmem>>, vector<1x16xf32>
    %4 = arith.addf %2, %3 : vector<1x16xf32>
    %c0_5 = arith.constant 0 : index
    %c0_6 = arith.constant 0 : index
    %5 = vector.load %arg3[%c0_5, %c0_6] : memref<1x16xf32, #tpu.memory_space<vmem>>, vector<1x16xf32>
    tpu.vector_store %arg3[%c0_5, %c0_6], %4 {strides = array<i32>} : memref<1x16xf32, #tpu.memory_space<vmem>>, vector<1x16xf32>,
    return
  }
}

</mosaic_0001>

<llo_original>
// kernel: tpu_custom_call.1
$region0: #{tpu_custom_call.1}
  #allocation0 [shape = 'u32[]', space=smem, size = 0x4, offset = 0x4, fixed_abs, tag = 'smem constant byte address 0x4 - core index']
  #allocation1 [shape = 'u32[144,128]{1,0:T(1,128)}', space=vmem, size = 0x12000, scoped, tag = 'internal scratch']
  %s0 = inlined_call_operand.vmem [shape: f32[1,32], index: 0, kind: input, shape index: {}]
  %s1 = inlined_call_operand.vmem [shape: f32[32,16], index: 1, kind: input, shape index: {}]
  %s2 = inlined_call_operand.vmem [shape: f32[1,16], index: 2, kind: input, shape index: {}]
  %s3 = inlined_call_operand.hbm [shape: f32[1,16], index: 3, kind: output, shape index: {}]
  %s4 = sld [smem:[#allocation0]]
  $region22: #{tpu_custom_call.1} parent=0
    _
  %s6 = ssub.s32 1, %s4
  %s7 = scalar_select 0, %s6, %s4
  $region1: #{tpu_custom_call.1} parent=0
    #allocation2 [shape = 'u8[512]{0}', space=vmem, size = 0x400, scoped, tag = 'output window, operand 0, single buffered']
    #allocation3 [shape = 's32[1]{0}', space=sflag, size = 0x4, scoped, tag = 'scoped memory for tpu_custom_call.1']
    %8 = vsyncpa [#allocation3], 0
    // Predicated region
    $region2: #{tpu_custom_call.1} parent=1 // pred_check
      _
    $region3: #{tpu_custom_call.1} parent=1 // pred_check_branch
      %10 = sbr.rel (0) target = $region5
    $region4: #{tpu_custom_call.1} parent=1 // pred_region
      _
    $region5: #{tpu_custom_call.1} parent=1 // pred_fallthru
      _
    // Predicated region
    $region6: #{tpu_custom_call.1} parent=1 // pred_check
      _
    $region7: #{tpu_custom_call.1} parent=1 // pred_check_branch
      %12 = sbr.rel (0) target = $region9
    $region8: #{tpu_custom_call.1} parent=1 // pred_region
      _
    $region9: #{tpu_custom_call.1} parent=1 // pred_fallthru
      _
    // Predicated region
    $region10: #{tpu_custom_call.1} parent=1 // pred_check
      _
    $region11: #{tpu_custom_call.1} parent=1 // pred_check_branch
      %14 = sbr.rel (0) target = $region13
    $region12: #{tpu_custom_call.1} parent=1 // pred_region
      _
    $region13: #{tpu_custom_call.1} parent=1 // pred_fallthru
      _
    %v15 = vld [vmem:[%s0] sm:$0x1]
    %v16 = vld [vmem:[%s1] sm:$0xff]
    %v17 = vld [vmem:[%s1 + $0x8] sm:$0xff]
    %v18 = vld [vmem:[%s1 + $0x10] sm:$0xff]
    %v19 = vld [vmem:[%s1 + $0x18] sm:$0xff]
    %v20 = vld [vmem:[%s2] sm:$0x1]
    %vm21 = vcmask 261120
    %v23 = vsel %vm21, %v15, 0
    %25 = vmatprep.subr.mxu0 0.0
    %26 = vmatpush1.msra.mxu0 %v16
    %27 = vmatprep.subr.mxu0 0.0
    %28 = vmatpush1.msra.mxu0 %v17
    %29 = vmatprep.subr.mxu0 0.0
    %30 = vmatpush1.msra.mxu0 %v18
    %31 = vmatprep.subr.mxu0 0.0
    %32 = vmatpush1.msra.mxu0 %v19
    %33 = vmatprep.subr.mxu0 0.0
    %34 = vmatpush1.msra.mxu0 0.0
    %35 = vmatprep.subr.mxu0 0.0
    %36 = vmatpush1.msra.mxu0 0.0
    %37 = vmatprep.subr.mxu0 0.0
    %38 = vmatpush1.msra.mxu0 0.0
    %39 = vmatprep.subr.mxu0 0.0
    %40 = vmatpush1.msra.mxu0 0.0
    %41 = vmatprep.subr.mxu0 0.0
    %42 = vmatpush1.msra.mxu0 0.0
    %43 = vmatprep.subr.mxu0 0.0
    %44 = vmatpush1.msra.mxu0 0.0
    %45 = vmatprep.subr.mxu0 0.0
    %46 = vmatpush1.msra.mxu0 0.0
    %47 = vmatprep.subr.mxu0 0.0
    %48 = vmatpush1.msra.mxu0 0.0
    %49 = vmatprep.subr.mxu0 0.0
    %50 = vmatpush1.msra.mxu0 0.0
    %51 = vmatprep.subr.mxu0 0.0
    %52 = vmatpush1.msra.mxu0 0.0
    %53 = vmatprep.subr.mxu0 0.0
    %54 = vmatpush1.msra.mxu0 0.0
    %55 = vmatprep.subr.mxu0 0.0
    %56 = vmatpush1.msra.mxu0 0.0
    %57 = vmatprep.subr.mxu0 0.0
    %58 = vmatpush1.msra.mxu0 0.0
    %59 = vmatprep.subr.mxu0 0.0
    %60 = vmatpush1.msra.mxu0 0.0
    %61 = vmatprep.subr.mxu0 0.0
    %62 = vmatpush1.msra.mxu0 0.0
    %63 = vmatprep.subr.mxu0 0.0
    %64 = vmatpush1.msra.mxu0 0.0
    %65 = vmatprep.subr.mxu0 0.0
    %66 = vmatpush1.msra.mxu0 0.0
    %67 = vmatprep.subr.mxu0 0.0
    %68 = vmatpush1.msra.mxu0 0.0
    %69 = vmatprep.subr.mxu0 0.0
    %70 = vmatpush1.msra.mxu0 0.0
    %71 = vmatprep.subr.mxu0 0.0
    %72 = vmatpush1.msra.mxu0 0.0
    %73 = vmatprep.subr.mxu0 0.0
    %74 = vmatpush1.msra.mxu0 0.0
    %75 = vmatprep.subr.mxu0 0.0
    %76 = vmatpush1.msra.mxu0 0.0
    %77 = vmatprep.subr.mxu0 0.0
    %78 = vmatpush1.msra.mxu0 0.0
    %79 = vmatprep.subr.mxu0 0.0
    %80 = vmatpush1.msra.mxu0 0.0
    %81 = vmatprep.subr.mxu0 0.0
    %82 = vmatpush1.msra.mxu0 0.0
    %83 = vmatprep.subr.mxu0 0.0
    %84 = vmatpush1.msra.mxu0 0.0
    %85 = vmatprep.subr.mxu0 0.0
    %86 = vmatpush1.msra.mxu0 0.0
    %87 = vmatprep.subr.mxu0 0.0
    %88 = vmatpush1.msra.mxu0 0.0
    %89 = vmatprep.mubr.f32.mxu0 0.0
    %90 = vmatmul.mubr.f32.gmra.mrb[0].mxu0 %v23
    %v91 = vpop.f32.mrb[0].mxu0
    %v92 = vadd.f32 %v20, %v91
    %v93 = vpop.f32.mrb[0].mxu0
    %94 = vdwg.mxu0
    %vm95 = vcmask 122880
    %96 = vst.msk [vmem:[#allocation2] sm:$0x1] %vm95, %v92
    // Predicated region
    $region14: #{tpu_custom_call.1} parent=1 // pred_check
      _
    $region15: #{tpu_custom_call.1} parent=1 // pred_check_branch
      %98 = sbr.rel (0) target = $region17
    $region16: #{tpu_custom_call.1} parent=1 // pred_region
      %s100 = ssub.s32 16, 16
      %101 = vsyncadd [#allocation3], %s100
      %s103 = sshll.u32 [#allocation2], 4
      %s104 = int_to_ptr.vmem [resolvable:$true] %s103
      %106 = dma.vmem_to_hbm [thread:$0]  %s104, 16, %s3, [#allocation3]
    $region17: #{tpu_custom_call.1} parent=1 // pred_fallthru
      _
    // Predicated region
    $region18: #{tpu_custom_call.1} parent=1 // pred_check
      _
    $region19: #{tpu_custom_call.1} parent=1 // pred_check_branch
      %108 = sbr.rel (0) target = $region21
    $region20: #{tpu_custom_call.1} parent=1 // pred_region
      %109 = dma.done [#allocation3], 16
    $region21: #{tpu_custom_call.1} parent=1 // pred_fallthru
      _
    %110 = vsyncpa [#allocation3], 1

</llo_original>
